<compile_context>
chip_gen: v6e
topology: v6e:2x2x1
jax: 0.10.0
libtpu: 0.0.40
codegen_flags: <defaults>
</compile_context>

<pallas_src>
import jax
import jax.numpy as jnp
from jax.experimental import pallas as pl
from jax.experimental.pallas import tpu as pltpu


def _round_up(x, m):
    return ((x + m - 1) // m) * m


def _argmax_last(s):
    # First-occurrence argmax over the tag axis (matches torch/jnp for finite
    # scores).  NOTE: an all-NaN row would yield index T (out of range) whereas
    # jnp.argmax returns the first NaN position -- harmless for real logits.
    t = s.shape[-1]
    col = jax.lax.broadcasted_iota(jnp.int32, s.shape, dimension=1)
    mx = jnp.max(s, axis=-1, keepdims=True)
    return jnp.min(jnp.where(s == mx, col, t), axis=-1, keepdims=True).astype(jnp.int32)


def _ner_kernel_scores(x_ref, w_ref, b_ref, scores_ref, argmax_ref):
    # x_ref: [rt, D], w_ref: [D, T], b_ref: [1, T]
    # scores_ref: [rt, T] (f32), argmax_ref: [rt, 1] (i32)
    s = jnp.dot(x_ref[...], w_ref[...], preferred_element_type=jnp.float32) + b_ref[...]
    scores_ref[...] = s.astype(scores_ref.dtype)
    argmax_ref[...] = _argmax_last(s)


def _ner_kernel_argmax_only(x_ref, w_ref, b_ref, argmax_ref):
    s = jnp.dot(x_ref[...], w_ref[...], preferred_element_type=jnp.float32) + b_ref[...]
    argmax_ref[...] = _argmax_last(s)


def _vmem_budget_bytes():
    """Per-generation scoped-VMEM budget with headroom for compiler scratch."""
    try:
        cap = int(pltpu.get_tpu_info().vmem_capacity_bytes)
    except Exception:
        cap = 64 * 1024 * 1024  # conservative (v7x-sized) fallback
    # ~48 MiB on v7x (64 MiB physical), capped at ~96 MiB on v5e/v6e (128 MiB).
    return min((cap * 3) // 4, 96 * 1024 * 1024)


def iobes_ner_decoder_forward(word_encodings, weight, bias, *,
                              row_tile=4096, emit_scores=True):
    """word_encodings: [B, S, D]; weight: [D, T]; bias: [T].

    Returns (scores [B, S, T] float32, output [B, S] int32) when
    emit_scores=True, else just output [B, S] int32.
    Dropout is identity (eval / dropout=0.0).

    To halve the dominant HBM read stream (biggest win on v5e), pass bf16
    word_encodings from the producer -- no cast is done here.
    """
    B, S, D = word_encodings.shape
    T = weight.shape[1]
    R = B * S

    x2d = word_encodings.reshape(R, D)
    # Only the tiny [D, T] weight is cast to match the producer dtype; casting
    # x here would re-stream the dominant array through HBM.
    if weight.dtype != x2d.dtype:
        weight = weight.astype(x2d.dtype)
    b2d = bias.astype(jnp.float32).reshape(1, T)

    itemsize = jnp.dtype(x2d.dtype).itemsize
    vmem_budget = _vmem_budget_bytes()

    def working_set(rt):
        # double-buffered x / scores / argmax tiles + resident weight & bias
        per_step = rt * D * itemsize + (rt * T * 4 if emit_scores else 0) + rt * 4
        resident = D * T * itemsize + T * 4
        return 2 * per_step + 2 * resident

    # Row tile: large (default 4096) to amortize per-step overhead, but
    #  * never more than cdiv(R, 2) (rounded to 16) so multi-TC chips (v7x)
    #    get >= 2 "parallel" grid steps,
    #  * shrunk until the double-buffered working set fits the VMEM budget,
    #  * always a multiple of 16 (bf16 sublane packing), >= 16.
    rt = max(16, _round_up(min(row_tile, R), 16))
    rt = min(rt, max(16, _round_up(pl.cdiv(R, 2), 16)))
    while rt > 16 and 2 * working_set(rt) > vmem_budget:
        rt = max(16, _round_up(rt // 2, 16))

    grid_rows = pl.cdiv(R, rt)
    vmem_limit = int(min(vmem_budget, max(16 * 1024 * 1024, 2 * working_set(rt))))

    bytes_accessed = (R * D * itemsize + (R * T * 4 if emit_scores else 0)
                      + R * 4 + D * T * itemsize + T * 4)
    cost = pl.CostEstimate(flops=2 * R * D * T, transcendentals=0,
                           bytes_accessed=bytes_accessed)

    in_specs = [
        pl.BlockSpec((rt, D), lambda i: (i, 0)),   # x row tile
        pl.BlockSpec((D, T), lambda i: (0, 0)),    # weight (resident)
        pl.BlockSpec((1, T), lambda i: (0, 0)),    # bias (resident)
    ]
    argmax_spec = pl.BlockSpec((rt, 1), lambda i: (i, 0))

    if emit_scores:
        kernel = _ner_kernel_scores
        out_shape = (jax.ShapeDtypeStruct((R, T), jnp.float32),
                     jax.ShapeDtypeStruct((R, 1), jnp.int32))
        out_specs = [pl.BlockSpec((rt, T), lambda i: (i, 0)), argmax_spec]
    else:
        kernel = _ner_kernel_argmax_only
        out_shape = jax.ShapeDtypeStruct((R, 1), jnp.int32)
        out_specs = argmax_spec

    result = pl.pallas_call(
        kernel,
        out_shape=out_shape,
        grid_spec=pltpu.PrefetchScalarGridSpec(
            num_scalar_prefetch=0,
            grid=(grid_rows,),
            in_specs=in_specs,
            out_specs=out_specs,
        ),
        compiler_params=pltpu.CompilerParams(
            # "parallel" lets multi-step row grids shard across v7x's 2 TCs.
            dimension_semantics=("parallel",),
            vmem_limit_bytes=vmem_limit,
        ),
        cost_estimate=cost,
    )(x2d, weight, b2d)

    if emit_scores:
        scores2d, argmax2d = result
        return scores2d.reshape(B, S, T), argmax2d.reshape(B, S)
    return result.reshape(B, S)


if __name__ == "__main__":
    # Small shapes consistent with the module: batch=2, seq=8, hidden=32.
    # Synthetic IOBES vocab with 2 entity types -> 9 tags (O + B/I/E/S x 2).
    B, S, D, T = 2, 8, 32, 9

    key = jax.random.PRNGKey(0)
    k_x, k_w, k_b, k_x2 = jax.random.split(key, 4)

    word_encodings = jax.random.normal(k_x, (B, S, D), dtype=jnp.float32)
    # Deterministic nn.Linear-style init (uniform in [-1/sqrt(D), 1/sqrt(D)]).
    bound = 1.0 / jnp.sqrt(jnp.float32(D))
    weight = jax.random.uniform(k_w, (D, T), jnp.float32, -bound, bound)
    bias = jax.random.uniform(k_b, (T,), jnp.float32, -bound, bound)

    scores, output = iobes_ner_decoder_forward(word_encodings, weight, bias)
    jax.block_until_ready((scores, output))

    # Reference check in plain JAX.
    ref_scores = word_encodings @ weight + bias
    ref_output = jnp.argmax(ref_scores, axis=-1).astype(jnp.int32)
    assert jnp.allclose(scores, ref_scores, atol=1e-5, rtol=1e-5)
    assert jnp.array_equal(output, ref_output)

    # Second shape exercising the non-divisible / multi-step row path
    # (B*S = 148 -> rt = 80, grid = 2, partial last block masked by Pallas).
    B2, S2 = 4, 37
    we2 = jax.random.normal(k_x2, (B2, S2, D), dtype=jnp.float32)
    sc2, out2 = iobes_ner_decoder_forward(we2, weight, bias)
    jax.block_until_ready((sc2, out2))
    ref_sc2 = we2 @ weight + bias
    ref_out2 = jnp.argmax(ref_sc2, axis=-1).astype(jnp.int32)
    assert jnp.allclose(sc2, ref_sc2, atol=1e-5, rtol=1e-5)
    assert jnp.array_equal(out2, ref_out2)

    # Argmax-only inference path (no scores writeback).
    out3 = iobes_ner_decoder_forward(we2, weight, bias, emit_scores=False)
    jax.block_until_ready(out3)
    assert jnp.array_equal(out3, ref_out2)

    # TODO(synk): iobes2pred / extract_iob / iobes2iob are string-level host-side
    # post-processing of the argmax ids and have no tensor/Pallas equivalent.
    print("KERNEL_OK")
</pallas_src>

<mosaic_0001>
module attributes {stable_mosaic.version = 11 : i64} {
  func.func @_ner_kernel_scores(%arg0: i32, %arg1: memref<16x32xf32, #tpu.memory_space<vmem>>, %arg2: memref<32x9xf32, #tpu.memory_space<vmem>>, %arg3: memref<1x9xf32, #tpu.memory_space<vmem>>, %arg4: memref<16x9xf32, #tpu.memory_space<vmem>>, %arg5: memref<16x1xi32, #tpu.memory_space<vmem>>) attributes {dimension_semantics = [#tpu.dimension_semantics<parallel>], iteration_bounds = array<i64: 1>, scalar_prefetch = 0 : i64, scratch_operands = 0 : i64, tpu.core_type = #tpu.core_type<tc>, window_params = [{transform_indices = @transform_0, window_bounds = array<i64: 16, 32>}, {pipeline_mode = #tpu.pipeline_mode<synchronous>, transform_indices = @transform_1, window_bounds = array<i64: 32, 9>}, {pipeline_mode = #tpu.pipeline_mode<synchronous>, transform_indices = @transform_2, window_bounds = array<i64: 1, 9>}, {transform_indices = @transform_3, window_bounds = array<i64: 16, 9>}, {transform_indices = @transform_4, window_bounds = array<i64: 16, 1>}]} {
    %c0 = arith.constant 0 : index
    %c0_0 = arith.constant 0 : index
    %0 = vector.load %arg1[%c0, %c0_0] : memref<16x32xf32, #tpu.memory_space<vmem>>, vector<16x32xf32>
    %c0_1 = arith.constant 0 : index
    %c0_2 = arith.constant 0 : index
    %1 = vector.load %arg2[%c0_1, %c0_2] : memref<32x9xf32, #tpu.memory_space<vmem>>, vector<32x9xf32>
    %cst = arith.constant dense<0.000000e+00> : vector<16x9xf32>
    %2 = tpu.matmul %0, %1, %cst {dimension_numbers = #tpu.dot_dimension_numbers<[1], [0], [0], [1], [0, 0, 1, 1], [], []>} : vector<16x32xf32>, vector<32x9xf32>, vector<16x9xf32> -> vector<16x9xf32>
    %c0_3 = arith.constant 0 : index
    %c0_4 = arith.constant 0 : index
    %3 = vector.load %arg3[%c0_3, %c0_4] : memref<1x9xf32, #tpu.memory_space<vmem>>, vector<1x9xf32>
    %4 = vector.broadcast %3 : vector<1x9xf32> to vector<16x9xf32>
    %5 = arith.addf %2, %4 : vector<16x9xf32>
    %c0_5 = arith.constant 0 : index
    %c0_6 = arith.constant 0 : index
    %6 = vector.load %arg4[%c0_5, %c0_6] : memref<16x9xf32, #tpu.memory_space<vmem>>, vector<16x9xf32>
    tpu.vector_store %arg4[%c0_5, %c0_6], %5 {strides = array<i32>} : memref<16x9xf32, #tpu.memory_space<vmem>>, vector<16x9xf32>,
    %7 = tpu.iota {dimensions = array<i32: 1>} : vector<16x9xi32>
    %cst_7 = arith.constant dense<0xFF800000> : vector<16xf32>
    %8 = vector.multi_reduction <maximumf>, %5, %cst_7 [1] : vector<16x9xf32> to vector<16xf32>
    %9 = vector.shape_cast %8 : vector<16xf32> to vector<16x1xf32>
    %10 = vector.broadcast %9 : vector<16x1xf32> to vector<16x9xf32>
    %11 = arith.cmpf oeq, %5, %10 : vector<16x9xf32>
    %c9_i32 = arith.constant 9 : i32
    %12 = vector.broadcast %c9_i32 : i32 to vector<16x9xi32>
    %13 = arith.select %11, %7, %12 : vector<16x9xi1>, vector<16x9xi32>
    %cst_8 = arith.constant dense<2147483647> : vector<16xi32>
    %14 = vector.multi_reduction <minsi>, %13, %cst_8 [1] : vector<16x9xi32> to vector<16xi32>
    %15 = vector.shape_cast %14 : vector<16xi32> to vector<16x1xi32>
    %c0_9 = arith.constant 0 : index
    %c0_10 = arith.constant 0 : index
    %16 = vector.load %arg5[%c0_9, %c0_10] : memref<16x1xi32, #tpu.memory_space<vmem>>, vector<16x1xi32>
    tpu.vector_store %arg5[%c0_9, %c0_10], %15 {strides = array<i32>} : memref<16x1xi32, #tpu.memory_space<vmem>>, vector<16x1xi32>,
    return
  }
  func.func @transform_0(%arg0: i32) -> (i32, i32) {
    %c0_i32 = arith.constant 0 : i32
    %c0_i32_0 = arith.constant 0 : i32
    return %arg0, %c0_i32 : i32, i32
  }
  func.func @transform_1(%arg0: i32) -> (i32, i32) {
    %c0_i32 = arith.constant 0 : i32
    %c0_i32_0 = arith.constant 0 : i32
    %c0_i32_1 = arith.constant 0 : i32
    return %c0_i32, %c0_i32_0 : i32, i32
  }
  func.func @transform_2(%arg0: i32) -> (i32, i32) {
    %c0_i32 = arith.constant 0 : i32
    %c0_i32_0 = arith.constant 0 : i32
    %c0_i32_1 = arith.constant 0 : i32
    return %c0_i32, %c0_i32_0 : i32, i32
  }
  func.func @transform_3(%arg0: i32) -> (i32, i32) {
    %c0_i32 = arith.constant 0 : i32
    %c0_i32_0 = arith.constant 0 : i32
    return %arg0, %c0_i32 : i32, i32
  }
  func.func @transform_4(%arg0: i32) -> (i32, i32) {
    %c0_i32 = arith.constant 0 : i32
    %c0_i32_0 = arith.constant 0 : i32
    return %arg0, %c0_i32 : i32, i32
  }
}

</mosaic_0001>

<llo_original>
// kernel: tpu_custom_call.1
$region0: #{tpu_custom_call.1}
  #allocation0 [shape = 'u32[]', space=smem, size = 0x4, offset = 0x4, fixed_abs, tag = 'smem constant byte address 0x4 - core index']
  #allocation1 [shape = 'u32[144,128]{1,0:T(1,128)}', space=vmem, size = 0x12000, scoped, tag = 'internal scratch']
  %s0 = inlined_call_operand.vmem [shape: f32[16,32], index: 0, kind: input, shape index: {}]
  %s1 = inlined_call_operand.vmem [shape: f32[32,9], index: 1, kind: input, shape index: {}]
  %s2 = inlined_call_operand.vmem [shape: f32[1,9], index: 2, kind: input, shape index: {}]
  %s3 = inlined_call_operand.hbm [shape: f32[16,9], index: 3, kind: output, shape index: {0}]
  %s4 = inlined_call_operand.vmem [shape: s32[16,1], index: 4, kind: output, shape index: {1}]
  %5 = xla_tuple %s3, %s4
  %s6 = sld [smem:[#allocation0]]
  $region30: #{tpu_custom_call.1} parent=0
    _
  %s8 = ssub.s32 1, %s6
  %s9 = scalar_select 0, %s8, %s6
  $region1: #{tpu_custom_call.1} parent=0
    #allocation2 [shape = 'u8[8192]{0}', space=vmem, size = 0x2000, scoped, tag = 'output window, operand 0, single buffered']
    #allocation3 [shape = 's32[1]{0}', space=sflag, size = 0x4, scoped, tag = 'scoped memory for tpu_custom_call.1']
    %10 = vsyncpa [#allocation3], 0
    // Predicated region
    $region2: #{tpu_custom_call.1} parent=1 // pred_check
      _
    $region3: #{tpu_custom_call.1} parent=1 // pred_check_branch
      %12 = sbr.rel (0) target = $region5
    $region4: #{tpu_custom_call.1} parent=1 // pred_region
      _
    $region5: #{tpu_custom_call.1} parent=1 // pred_fallthru
      _
    // Predicated region
    $region6: #{tpu_custom_call.1} parent=1 // pred_check
      _
    $region7: #{tpu_custom_call.1} parent=1 // pred_check_branch
      %14 = sbr.rel (0) target = $region9
    $region8: #{tpu_custom_call.1} parent=1 // pred_region
      _
    $region9: #{tpu_custom_call.1} parent=1 // pred_fallthru
      _
    // Predicated region
    $region10: #{tpu_custom_call.1} parent=1 // pred_check
      _
    $region11: #{tpu_custom_call.1} parent=1 // pred_check_branch
      %16 = sbr.rel (0) target = $region13
    $region12: #{tpu_custom_call.1} parent=1 // pred_region
      _
    $region13: #{tpu_custom_call.1} parent=1 // pred_fallthru
      _
    %v17 = vld [vmem:[%s0] sm:$0xff]
    %v18 = vld [vmem:[%s0 + $0x8] sm:$0xff]
    %v19 = vld [vmem:[%s1] sm:$0xff]
    %v20 = vld [vmem:[%s1 + $0x8] sm:$0xff]
    %v21 = vld [vmem:[%s1 + $0x10] sm:$0xff]
    %v22 = vld [vmem:[%s1 + $0x18] sm:$0xff]
    %v23 = vld [vmem:[%s2] sm:$0x1]
    %v25 = vlaneseq
    %v26 = vshrl.u32 %v25, 7
    %v27 = vsub.s32 0, %v26
    %v28 = vrot.slane %v23, %v27
    %vm30 = vcmask 261120
    %v32 = vsel %vm30, %v17, 0
    %v35 = vsel %vm30, %v18, 0
    %37 = vmatprep.subr.mxu0 0.0
    %38 = vmatpush1.msra.mxu0 0.0
    %39 = vmatprep.subr.mxu0 0.0
    %40 = vmatpush1.msra.mxu0 0.0
    %41 = vmatprep.subr.mxu0 0.0
    %42 = vmatpush1.msra.mxu0 0.0
    %43 = vmatprep.subr.mxu0 0.0
    %44 = vmatpush1.msra.mxu0 0.0
    %45 = vmatprep.subr.mxu0 0.0
    %46 = vmatpush1.msra.mxu0 0.0
    %47 = vmatprep.subr.mxu0 0.0
    %48 = vmatpush1.msra.mxu0 0.0
    %49 = vmatprep.subr.mxu0 0.0
    %50 = vmatpush1.msra.mxu0 0.0
    %51 = vmatprep.subr.mxu0 0.0
    %52 = vmatpush1.msra.mxu0 0.0
    %53 = vmatprep.subr.mxu0 0.0
    %54 = vmatpush1.msra.mxu0 0.0
    %55 = vmatprep.subr.mxu0 0.0
    %56 = vmatpush1.msra.mxu0 0.0
    %57 = vmatprep.subr.mxu0 0.0
    %58 = vmatpush1.msra.mxu0 0.0
    %59 = vmatprep.subr.mxu0 0.0
    %60 = vmatpush1.msra.mxu0 0.0
    %61 = vmatprep.subr.mxu0 0.0
    %62 = vmatpush1.msra.mxu0 %v22
    %63 = vmatprep.subr.mxu0 0.0
    %64 = vmatpush1.msra.mxu0 %v21
    %65 = vmatprep.subr.mxu0 0.0
    %66 = vmatpush1.msra.mxu0 %v20
    %67 = vmatprep.subr.mxu0 0.0
    %68 = vmatpush1.msra.mxu0 %v19
    %69 = vmatprep.subr.mxu0 0.0
    %70 = vmatpush2.msra.mxu0 0.0
    %71 = vmatprep.subr.mxu0 0.0
    %72 = vmatpush2.msra.mxu0 0.0
    %73 = vmatprep.subr.mxu0 0.0
    %74 = vmatpush2.msra.mxu0 0.0
    %75 = vmatprep.subr.mxu0 0.0
    %76 = vmatpush2.msra.mxu0 0.0
    %77 = vmatprep.subr.mxu0 0.0
    %78 = vmatpush2.msra.mxu0 0.0
    %79 = vmatprep.subr.mxu0 0.0
    %80 = vmatpush2.msra.mxu0 0.0
    %81 = vmatprep.subr.mxu0 0.0
    %82 = vmatpush2.msra.mxu0 0.0
    %83 = vmatprep.subr.mxu0 0.0
    %84 = vmatpush2.msra.mxu0 0.0
    %85 = vmatprep.subr.mxu0 0.0
    %86 = vmatpush2.msra.mxu0 0.0
    %87 = vmatprep.subr.mxu0 0.0
    %88 = vmatpush2.msra.mxu0 0.0
    %89 = vmatprep.subr.mxu0 0.0
    %90 = vmatpush2.msra.mxu0 0.0
    %91 = vmatprep.subr.mxu0 0.0
    %92 = vmatpush2.msra.mxu0 0.0
    %93 = vmatprep.subr.mxu0 0.0
    %94 = vmatpush2.msra.mxu0 0.0
    %95 = vmatprep.subr.mxu0 0.0
    %96 = vmatpush2.msra.mxu0 0.0
    %97 = vmatprep.subr.mxu0 0.0
    %98 = vmatpush2.msra.mxu0 0.0
    %99 = vmatprep.subr.mxu0 0.0
    %100 = vmatpush2.msra.mxu0 0.0
    %101 = vmatprep.mubr.f32.mxu0 0.0
    %102 = vmatmul.mubr.f32.gmra.mxu0 %v32
    %v103 = vpop.f32.mrf.mxu0
    %v104 = vadd.f32 %v28, %v103
    %v105 = vpop.f32.mrf.mxu0
    %106 = vmatprep.mubr.f32.mxu0 0.0
    %107 = vmatmul.mubr.f32.gmra.mxu0 %v35
    %v108 = vpop.f32.mrf.mxu0
    %v109 = vadd.f32 %v28, %v108
    %v110 = vpop.f32.mrf.mxu0
    %111 = vdwg.mxu0
    %vm112 = vcmask 72704
    %113 = vst.msk [vmem:[#allocation2] sm:$0xff] %vm112, %v104
    %114 = vst.msk [vmem:[#allocation2 + $0x8] sm:$0xff] %vm112, %v109
    %v115 = vlaneseq
    %v116 = vand.u32 %v115, 127
    %v117 = vsel %vm112, %v104, -inf
    %118 = vmax.xlane.f32.xlu0 %v117
    %v119 = vpop.xlane.xlu0 %118
    %v120 = vsel %vm112, %v109, -inf
    %121 = vmax.xlane.f32.xlu0 %v120
    %v122 = vpop.xlane.xlu0 %121
    %vm123 = vcmp.eq.f32.partialorder %v104, %v119
    %vm124 = vcmp.eq.f32.partialorder %v109, %v122
    %v125 = vsel %vm123, %v116, 9
    %v126 = vsel %vm124, %v116, 9
    %v127 = vsel %vm112, %v125, 2147483647
    %v128 = vand.u32 %v127, 65535
    %v129 = vshra.s32 %v127, 16
    %v130 = vcvt.s32.f32 %v128
    %v131 = vcvt.s32.f32 %v129
    %132 = vmin.xlane.f32.xlu0 %v131
    %v133 = vpop.xlane.xlu0 %132
    %vm134 = vcmp.eq.f32.partialorder %v131, %v133
    %v135 = vsel %vm134, %v130, inf
    %136 = vmin.xlane.f32.xlu0 %v135
    %v137 = vpop.xlane.xlu0 %136
    %v138 = vcvt.f32.s32 %v137
    %v139 = vcvt.f32.s32 %v133
    %v140 = vshll.u32 %v139, 16
    %v141 = vadd.s32 %v140, %v138
    %v142 = vsel %vm112, %v126, 2147483647
    %v143 = vand.u32 %v142, 65535
    %v144 = vshra.s32 %v142, 16
    %v145 = vcvt.s32.f32 %v143
    %v146 = vcvt.s32.f32 %v144
    %147 = vmin.xlane.f32.xlu0 %v146
    %v148 = vpop.xlane.xlu0 %147
    %vm149 = vcmp.eq.f32.partialorder %v146, %v148
    %v150 = vsel %vm149, %v145, inf
    %151 = vmin.xlane.f32.xlu0 %v150
    %v152 = vpop.xlane.xlu0 %151
    %v153 = vcvt.f32.s32 %v152
    %v154 = vcvt.f32.s32 %v148
    %v155 = vshll.u32 %v154, 16
    %v156 = vadd.s32 %v155, %v153
    %vm157 = vcmask 7168
    %158 = vst.msk [vmem:[%s4] sm:$0xff] %vm157, %v141
    %159 = vst.msk [vmem:[%s4 + $0x8] sm:$0xff] %vm157, %v156
    // Predicated region
    $region14: #{tpu_custom_call.1} parent=1 // pred_check
      _
    $region15: #{tpu_custom_call.1} parent=1 // pred_check_branch
      %161 = sbr.rel (0) target = $region17
    $region16: #{tpu_custom_call.1} parent=1 // pred_region
      %s163 = ssub.s32 256, 256
      %164 = vsyncadd [#allocation3], %s163
      %s165 = sshll.u32 [#allocation2], 4
      %s166 = int_to_ptr.vmem [resolvable:$true] %s165
      %171 = dma.vmem_to_hbm [thread:$0]  %s166, 256, %s3, [#allocation3], 128, 128, 8
    $region17: #{tpu_custom_call.1} parent=1 // pred_fallthru
      _
    // Predicated region
    $region18: #{tpu_custom_call.1} parent=1 // pred_check
      _
    $region19: #{tpu_custom_call.1} parent=1 // pred_check_branch
      %173 = sbr.rel (0) target = $region21
    $region20: #{tpu_custom_call.1} parent=1 // pred_region
      _
    $region21: #{tpu_custom_call.1} parent=1 // pred_fallthru
      _
    // Predicated region
    $region22: #{tpu_custom_call.1} parent=1 // pred_check
      _
    $region23: #{tpu_custom_call.1} parent=1 // pred_check_branch
      %175 = sbr.rel (0) target = $region25
    $region24: #{tpu_custom_call.1} parent=1 // pred_region
      %176 = dma.done [#allocation3], 256
    $region25: #{tpu_custom_call.1} parent=1 // pred_fallthru
      _
    // Predicated region
    $region26: #{tpu_custom_call.1} parent=1 // pred_check
      _
    $region27: #{tpu_custom_call.1} parent=1 // pred_check_branch
      %178 = sbr.rel (0) target = $region29
    $region28: #{tpu_custom_call.1} parent=1 // pred_region
      _
    $region29: #{tpu_custom_call.1} parent=1 // pred_fallthru
      _
    %179 = vsyncpa [#allocation3], 1

</llo_original>
